<compile_context>
chip_gen: v7x
topology: tpu7x:2x2x1
jax: 0.10.0
libtpu: 0.0.40
codegen_flags: <defaults>
</compile_context>

<pallas_src>
import math

import numpy as np
import jax
import jax.numpy as jnp
from jax.experimental import pallas as pl
from jax.experimental.pallas import tpu as pltpu


_NEG_INF = -1e30  # plain Python float: finite "minus infinity" (no inf-inf NaNs,
                  # and not a captured traced constant)


def _round_up(x, m):
    return ((x + m - 1) // m) * m


def _pad_rows(x, rows):
    if x.shape[0] == rows:
        return x
    return jnp.pad(x, ((0, rows - x.shape[0]), (0, 0)))


def _vmem_cap_bytes():
    """~75% of physical VMEM for this generation (48 MiB on v7x, 96 MiB on
    v5e/v6e); falls back to the conservative 48 MiB if the query fails."""
    try:
        cap = int(pltpu.get_tpu_info().vmem_capacity_bytes)
    except Exception:
        cap = 64 << 20
    return (cap * 3) // 4


def _maybe_vmem_limit(block_bytes):
    # Only raise the scoped-VMEM limit above the per-generation defaults when
    # the (honestly accounted) working set actually needs it.
    if block_bytes <= (8 << 20):
        return None
    return int(min(block_bytes + (16 << 20), _vmem_cap_bytes()))


def _pick_m_tiling(M, tile_m_default):
    """Pick tile_m so the 'parallel' M axis has >= 2 grid steps whenever
    M > 8 (keeps both v7x TensorCores busy)."""
    tile_m = min(tile_m_default, _round_up(M, 8))
    m_pad = _round_up(M, tile_m)
    if m_pad // tile_m < 2 and M > 8:
        tile_m = _round_up(-(-M // 2), 8)
        m_pad = _round_up(M, tile_m)
    return tile_m, m_pad


# ----------------------------------------------------------------------------
# forward(): Gaussian KDE log-density, diffs-free, MXU-based
# ----------------------------------------------------------------------------
def _fwd_kernel(tsc_ref, rowb_ref, train_ref, colb_ref, logp_ref, m_sc, s_sc):
    j = pl.program_id(1)

    @pl.when(j == 0)
    def _init():
        m_sc[...] = jnp.full_like(m_sc, _NEG_INF)
        s_sc[...] = jnp.zeros_like(s_sc)

    t = tsc_ref[...]      # (tile_m, D), already scaled by 1/var
    s = train_ref[...]    # (tile_n, D)

    # scores = t.s^T / var - ||s||^2/(2 var)  (pad columns carry -1e30 in the
    # column bias; the per-row -||t||^2/(2 var) + log_norm term is added once
    # at finalize since logsumexp(s + c) = c + logsumexp(s)).
    scores = jax.lax.dot_general(                      # MXU, (tile_m, tile_n)
        t, s, (((1,), (1,)), ((), ())),
        preferred_element_type=jnp.float32)
    scores = scores + colb_ref[...]                    # single broadcast add

    # Online log-sum-exp over the train (N) grid axis.
    m_prev = m_sc[...]
    m_new = jnp.maximum(m_prev, jnp.max(scores, axis=1, keepdims=True))
    alpha = jnp.exp(m_prev - m_new)
    p = jnp.exp(scores - m_new)                        # EUP
    p_sum = jnp.sum(p, axis=1, keepdims=True)          # XLU row-sum (MXU busy)
    s_sc[...] = alpha * s_sc[...] + p_sum
    m_sc[...] = m_new

    @pl.when(j == pl.num_programs(1) - 1)
    def _finalize():
        logp_ref[...] = (rowb_ref[...] + m_sc[...] + jnp.log(s_sc[...])
                         ).astype(logp_ref.dtype)


def gaussian_kde_forward(test_Xs, train_Xs, bandwidth=1.0, *,
                         tile_m=512, tile_n=1024):
    M, D = test_Xs.shape
    N, Dt = train_Xs.shape
    assert D == Dt

    var = float(bandwidth) ** 2
    inv_var = 1.0 / var
    inv_two_var = 0.5 / var
    log_norm = float(-0.5 * np.log(2.0 * np.pi * var) - np.log(float(N)))

    tile_m, m_pad = _pick_m_tiling(M, tile_m)
    # MXU-friendly N tiles: multiples of 256 (fully-populated vregs / MXU
    # output tiles); pad columns are neutralized via the column bias.
    tile_n = min(tile_n, _round_up(N, 256))
    n_pad = _round_up(N, tile_n)

    test_f = test_Xs.astype(jnp.float32)
    train_f = train_Xs.astype(jnp.float32)

    # Pre-scaled test (so the MXU dot yields t.s / var directly).
    test_scaled = _pad_rows(test_f * inv_var, m_pad)
    # Per-row bias, added once at finalize (also folds log coef - log N).
    row_bias = _pad_rows(
        -jnp.sum(test_f * test_f, axis=1, keepdims=True) * inv_two_var
        + log_norm, m_pad)
    # Train tiles + per-column bias (pad columns -> -1e30, i.e. masked out).
    train_p = _pad_rows(train_f, n_pad)
    s_sq = jnp.sum(train_p * train_p, axis=1)
    col_bias = (-s_sq * inv_two_var)[None, :]                       # (1, n_pad)
    if n_pad != N:
        col_idx = jnp.arange(n_pad)[None, :]
        col_bias = jnp.where(col_idx < N, col_bias, jnp.float32(_NEG_INF))

    # Honest VMEM accounting: double-buffered inputs/outputs + the
    # (tile_m x tile_n) in-kernel temporaries (scores / p / max-broadcast).
    block_bytes = 4 * (2 * (tile_m * D + tile_m + tile_n * D + tile_n + tile_m)
                       + 2 * tile_m
                       + 3 * tile_m * tile_n)
    vmem_limit = _maybe_vmem_limit(block_bytes)

    logp = pl.pallas_call(
        _fwd_kernel,
        out_shape=jax.ShapeDtypeStruct((m_pad, 1), jnp.float32),
        grid_spec=pltpu.PrefetchScalarGridSpec(
            num_scalar_prefetch=0,
            grid=(m_pad // tile_m, n_pad // tile_n),
            in_specs=[
                pl.BlockSpec((tile_m, D), lambda i, j: (i, 0)),   # test/var
                pl.BlockSpec((tile_m, 1), lambda i, j: (i, 0)),   # row bias
                pl.BlockSpec((tile_n, D), lambda i, j: (j, 0)),   # train tile
                pl.BlockSpec((1, tile_n), lambda i, j: (0, j)),   # col bias
            ],
            out_specs=pl.BlockSpec((tile_m, 1), lambda i, j: (i, 0)),
            scratch_shapes=[
                pltpu.VMEM((tile_m, 1), jnp.float32),   # running max
                pltpu.VMEM((tile_m, 1), jnp.float32),   # running sum(exp)
            ],
        ),
        compiler_params=pltpu.CompilerParams(
            dimension_semantics=("parallel", "arbitrary"),
            vmem_limit_bytes=vmem_limit,
        ),
    )(test_scaled, row_bias, train_p, col_bias)
    return logp[:M, 0]


# ----------------------------------------------------------------------------
# _diffs(): pairwise differences, lane-dense flattened blocks on an (M,N) grid
# ----------------------------------------------------------------------------
def _make_diffs_kernel(tile_n):
    def diffs_kernel(test_ref, train_flat_ref, out_ref):
        t = test_ref[...]                          # (tile_m, D)
        s_flat = train_flat_ref[...]               # (1, tile_n*D)
        # out[i, jj*D + d] = t[i, d] - s[jj, d]   (lane-dense flattened block)
        t_rep = jnp.tile(t, (1, tile_n))           # small replication only
        out_ref[...] = (t_rep - s_flat).astype(out_ref.dtype)
    return diffs_kernel


def pairwise_diffs(test_Xs, train_Xs):
    M, D = test_Xs.shape
    N, Dt = train_Xs.shape
    assert D == Dt

    # tile_n: smallest count with tile_n*D a multiple of 128 (unmasked lane-
    # dense stores), grown a little (<= 512 lanes, <= 16 rows) to amortize
    # per-step overhead while keeping the in-kernel replication tiny.
    tn_unit = 128 // math.gcd(D, 128)
    tile_n = tn_unit
    while tile_n * 2 * D <= 512 and tile_n * 2 <= 16:
        tile_n *= 2
    n_pad = _round_up(N, tile_n)

    # tile_m: biggest tile whose double-buffered output block plus the
    # in-kernel (tile_m, tile_n*D) intermediate stays well inside VMEM.
    tile_m = 8
    for cand in (512, 256, 128, 64, 32, 16, 8):
        blk = 4 * (3 * cand * tile_n * D + 2 * cand * D + 2 * tile_n * D)
        if cand <= _round_up(M, 8) and blk <= (24 << 20):
            tile_m = cand
            break
    tile_m, m_pad = _pick_m_tiling(M, tile_m)

    test_p = _pad_rows(test_Xs.astype(jnp.float32), m_pad)
    train_flat = _pad_rows(train_Xs.astype(jnp.float32), n_pad
                           ).reshape(1, n_pad * D)

    block_bytes = 4 * (2 * tile_m * D + 2 * tile_n * D
                       + 3 * tile_m * tile_n * D)
    vmem_limit = _maybe_vmem_limit(block_bytes)

    diffs_flat = pl.pallas_call(
        _make_diffs_kernel(tile_n),
        out_shape=jax.ShapeDtypeStruct((m_pad, n_pad * D), jnp.float32),
        grid_spec=pltpu.PrefetchScalarGridSpec(
            num_scalar_prefetch=0,
            grid=(m_pad // tile_m, n_pad // tile_n),
            in_specs=[
                pl.BlockSpec((tile_m, D), lambda i, j: (i, 0)),        # test
                pl.BlockSpec((1, tile_n * D), lambda i, j: (0, j)),    # train
            ],
            out_specs=pl.BlockSpec((tile_m, tile_n * D), lambda i, j: (i, j)),
        ),
        compiler_params=pltpu.CompilerParams(
            dimension_semantics=("parallel", "parallel"),
            vmem_limit_bytes=vmem_limit,
        ),
    )(test_p, train_flat)
    return diffs_flat.reshape(m_pad, n_pad, D)[:M, :N]


# ----------------------------------------------------------------------------
# Module wrapper mirroring the PyTorch class
# ----------------------------------------------------------------------------
class GaussianKernelKDE:
    """JAX/Pallas port of the `Kernel` base class (+ the standard Gaussian
    forward built on top of it)."""

    def __init__(self, bandwidth=1.0):
        self.bandwidth = bandwidth

    def _diffs(self, test_Xs, train_Xs):
        return pairwise_diffs(test_Xs, train_Xs)

    def forward(self, test_Xs, train_Xs):
        """log p(x) for each x in test_Xs given train_Xs (diffs-free path)."""
        return gaussian_kde_forward(test_Xs, train_Xs, self.bandwidth)

    __call__ = forward

    def sample(self, train_Xs):
        # TODO(synk): abstract random sampling is not implemented as a Pallas kernel.
        raise NotImplementedError


# ----------------------------------------------------------------------------
# Pure-JAX reference mirroring the PyTorch semantics
# ----------------------------------------------------------------------------
def _reference(test_Xs, train_Xs, bandwidth):
    diffs = test_Xs[:, None, :] - train_Xs[None, :, :]
    x_sq = jnp.sum(diffs ** 2, axis=-1)
    var = bandwidth ** 2
    z = (1.0 / jnp.sqrt(2 * jnp.pi * var)) * jnp.exp(-x_sq / (2 * var))
    return diffs, jnp.log(jnp.mean(z, axis=1))


if __name__ == "__main__":
    key = jax.random.PRNGKey(0)
    k1, k2 = jax.random.split(key)

    M, N, D = 16, 16, 32   # small demo shapes: 16 test pts, 16 train pts, 32 features
    test_Xs = jax.random.normal(k1, (M, D), dtype=jnp.float32)
    train_Xs = jax.random.normal(k2, (N, D), dtype=jnp.float32)

    kde = GaussianKernelKDE(bandwidth=1.0)
    logp = kde.forward(test_Xs, train_Xs)      # fused, diffs-free hot path
    diffs = kde._diffs(test_Xs, train_Xs)      # base-class _diffs kernel
    jax.block_until_ready((logp, diffs))

    ref_diffs, ref_logp = _reference(test_Xs, train_Xs, 1.0)
    np.testing.assert_allclose(np.asarray(diffs), np.asarray(ref_diffs),
                               rtol=1e-5, atol=1e-5)
    np.testing.assert_allclose(np.asarray(logp), np.asarray(ref_logp),
                               rtol=1e-4, atol=1e-3)

    print("KERNEL_OK")
</pallas_src>

<mosaic_0001>
module attributes {stable_mosaic.version = 11 : i64} {
  func.func @_fwd_kernel(%arg0: i32, %arg1: i32, %arg2: memref<8x32xf32, #tpu.memory_space<vmem>>, %arg3: memref<8x1xf32, #tpu.memory_space<vmem>>, %arg4: memref<256x32xf32, #tpu.memory_space<vmem>>, %arg5: memref<1x256xf32, #tpu.memory_space<vmem>>, %arg6: memref<8x1xf32, #tpu.memory_space<vmem>>, %arg7: memref<8x1xf32, #tpu.memory_space<vmem>>, %arg8: memref<8x1xf32, #tpu.memory_space<vmem>>) attributes {dimension_semantics = [#tpu.dimension_semantics<parallel>, #tpu.dimension_semantics<arbitrary>], iteration_bounds = array<i64: 2, 1>, scalar_prefetch = 0 : i64, scratch_operands = 2 : i64, tpu.core_type = #tpu.core_type<tc>, window_params = [{transform_indices = @transform_0, window_bounds = array<i64: 8, 32>}, {transform_indices = @transform_1, window_bounds = array<i64: 8, 1>}, {transform_indices = @transform_2, window_bounds = array<i64: 256, 32>}, {transform_indices = @transform_3, window_bounds = array<i64: 1, 256>}, {transform_indices = @transform_4, window_bounds = array<i64: 8, 1>}]} {
    %c0_i32 = arith.constant 0 : i32
    %0 = arith.cmpi eq, %arg1, %c0_i32 : i32
    %1 = arith.extui %0 : i1 to i32
    %c0_i32_0 = arith.constant 0 : i32
    %2 = arith.cmpi ne, %1, %c0_i32_0 : i32
    scf.if %2 {
      %cst_18 = arith.constant -1.000000e+30 : f32
      %28 = vector.broadcast %cst_18 : f32 to vector<8x1xf32>
      %c0_19 = arith.constant 0 : index
      %c0_20 = arith.constant 0 : index
      %29 = vector.load %arg7[%c0_19, %c0_20] : memref<8x1xf32, #tpu.memory_space<vmem>>, vector<8x1xf32>
      tpu.vector_store %arg7[%c0_19, %c0_20], %28 {strides = array<i32>} : memref<8x1xf32, #tpu.memory_space<vmem>>, vector<8x1xf32>,
      %cst_21 = arith.constant 0.000000e+00 : f32
      %30 = vector.broadcast %cst_21 : f32 to vector<8x1xf32>
      %c0_22 = arith.constant 0 : index
      %c0_23 = arith.constant 0 : index
      %31 = vector.load %arg8[%c0_22, %c0_23] : memref<8x1xf32, #tpu.memory_space<vmem>>, vector<8x1xf32>
      tpu.vector_store %arg8[%c0_22, %c0_23], %30 {strides = array<i32>} : memref<8x1xf32, #tpu.memory_space<vmem>>, vector<8x1xf32>,
    } else {
    }
    %c0 = arith.constant 0 : index
    %c0_1 = arith.constant 0 : index
    %3 = vector.load %arg2[%c0, %c0_1] : memref<8x32xf32, #tpu.memory_space<vmem>>, vector<8x32xf32>
    %c0_2 = arith.constant 0 : index
    %c0_3 = arith.constant 0 : index
    %4 = vector.load %arg4[%c0_2, %c0_3] : memref<256x32xf32, #tpu.memory_space<vmem>>, vector<256x32xf32>
    %cst = arith.constant dense<0.000000e+00> : vector<8x256xf32>
    %5 = tpu.matmul %3, %4, %cst {dimension_numbers = #tpu.dot_dimension_numbers<[1], [1], [0], [0], [0, 0, 1, 0], [], []>} : vector<8x32xf32>, vector<256x32xf32>, vector<8x256xf32> -> vector<8x256xf32>
    %c0_4 = arith.constant 0 : index
    %c0_5 = arith.constant 0 : index
    %6 = vector.load %arg5[%c0_4, %c0_5] : memref<1x256xf32, #tpu.memory_space<vmem>>, vector<1x256xf32>
    %7 = vector.broadcast %6 : vector<1x256xf32> to vector<8x256xf32>
    %8 = arith.addf %5, %7 : vector<8x256xf32>
    %c0_6 = arith.constant 0 : index
    %c0_7 = arith.constant 0 : index
    %9 = vector.load %arg7[%c0_6, %c0_7] : memref<8x1xf32, #tpu.memory_space<vmem>>, vector<8x1xf32>
    %cst_8 = arith.constant dense<0xFF800000> : vector<8xf32>
    %10 = vector.multi_reduction <maximumf>, %8, %cst_8 [1] : vector<8x256xf32> to vector<8xf32>
    %11 = vector.shape_cast %10 : vector<8xf32> to vector<8x1xf32>
    %12 = arith.maximumf %9, %11 : vector<8x1xf32>
    %13 = arith.subf %9, %12 : vector<8x1xf32>
    %14 = math.exp %13 : vector<8x1xf32>
    %15 = vector.broadcast %12 : vector<8x1xf32> to vector<8x256xf32>
    %16 = arith.subf %8, %15 : vector<8x256xf32>
    %17 = math.exp %16 : vector<8x256xf32>
    %cst_9 = arith.constant dense<0.000000e+00> : vector<8xf32>
    %18 = vector.multi_reduction <add>, %17, %cst_9 [1] : vector<8x256xf32> to vector<8xf32>
    %19 = vector.shape_cast %18 : vector<8xf32> to vector<8x1xf32>
    %c0_10 = arith.constant 0 : index
    %c0_11 = arith.constant 0 : index
    %20 = vector.load %arg8[%c0_10, %c0_11] : memref<8x1xf32, #tpu.memory_space<vmem>>, vector<8x1xf32>
    %21 = arith.mulf %14, %20 : vector<8x1xf32>
    %22 = arith.addf %21, %19 : vector<8x1xf32>
    %c0_12 = arith.constant 0 : index
    %c0_13 = arith.constant 0 : index
    %23 = vector.load %arg8[%c0_12, %c0_13] : memref<8x1xf32, #tpu.memory_space<vmem>>, vector<8x1xf32>
    tpu.vector_store %arg8[%c0_12, %c0_13], %22 {strides = array<i32>} : memref<8x1xf32, #tpu.memory_space<vmem>>, vector<8x1xf32>,
    %c0_14 = arith.constant 0 : index
    %c0_15 = arith.constant 0 : index
    %24 = vector.load %arg7[%c0_14, %c0_15] : memref<8x1xf32, #tpu.memory_space<vmem>>, vector<8x1xf32>
    tpu.vector_store %arg7[%c0_14, %c0_15], %12 {strides = array<i32>} : memref<8x1xf32, #tpu.memory_space<vmem>>, vector<8x1xf32>,
    %c0_i32_16 = arith.constant 0 : i32
    %25 = arith.cmpi eq, %arg1, %c0_i32_16 : i32
    %26 = arith.extui %25 : i1 to i32
    %c0_i32_17 = arith.constant 0 : i32
    %27 = arith.cmpi ne, %26, %c0_i32_17 : i32
    scf.if %27 {
      %c0_18 = arith.constant 0 : index
      %c0_19 = arith.constant 0 : index
      %28 = vector.load %arg3[%c0_18, %c0_19] : memref<8x1xf32, #tpu.memory_space<vmem>>, vector<8x1xf32>
      %c0_20 = arith.constant 0 : index
      %c0_21 = arith.constant 0 : index
      %29 = vector.load %arg7[%c0_20, %c0_21] : memref<8x1xf32, #tpu.memory_space<vmem>>, vector<8x1xf32>
      %30 = arith.addf %28, %29 : vector<8x1xf32>
      %c0_22 = arith.constant 0 : index
      %c0_23 = arith.constant 0 : index
      %31 = vector.load %arg8[%c0_22, %c0_23] : memref<8x1xf32, #tpu.memory_space<vmem>>, vector<8x1xf32>
      %32 = math.log %31 : vector<8x1xf32>
      %33 = arith.addf %30, %32 : vector<8x1xf32>
      %c0_24 = arith.constant 0 : index
      %c0_25 = arith.constant 0 : index
      %34 = vector.load %arg6[%c0_24, %c0_25] : memref<8x1xf32, #tpu.memory_space<vmem>>, vector<8x1xf32>
      tpu.vector_store %arg6[%c0_24, %c0_25], %33 {strides = array<i32>} : memref<8x1xf32, #tpu.memory_space<vmem>>, vector<8x1xf32>,
    } else {
    }
    return
  }
  func.func @transform_0(%arg0: i32, %arg1: i32) -> (i32, i32) {
    %c0_i32 = arith.constant 0 : i32
    %c0_i32_0 = arith.constant 0 : i32
    return %arg0, %c0_i32 : i32, i32
  }
  func.func @transform_1(%arg0: i32, %arg1: i32) -> (i32, i32) {
    %c0_i32 = arith.constant 0 : i32
    %c0_i32_0 = arith.constant 0 : i32
    return %arg0, %c0_i32 : i32, i32
  }
  func.func @transform_2(%arg0: i32, %arg1: i32) -> (i32, i32) {
    %c0_i32 = arith.constant 0 : i32
    %c0_i32_0 = arith.constant 0 : i32
    return %arg1, %c0_i32 : i32, i32
  }
  func.func @transform_3(%arg0: i32, %arg1: i32) -> (i32, i32) {
    %c0_i32 = arith.constant 0 : i32
    %c0_i32_0 = arith.constant 0 : i32
    return %c0_i32, %arg1 : i32, i32
  }
  func.func @transform_4(%arg0: i32, %arg1: i32) -> (i32, i32) {
    %c0_i32 = arith.constant 0 : i32
    %c0_i32_0 = arith.constant 0 : i32
    return %arg0, %c0_i32 : i32, i32
  }
}

</mosaic_0001>

<llo_original>
// kernel: tpu_custom_call.1
$region0: #{tpu_custom_call.1}
  #allocation0 [shape = 'u32[]', space=smem, size = 0x4, offset = 0x4, fixed_abs, tag = 'smem constant byte address 0x4 - core index']
  #allocation1 [shape = 'u32[144,128]{1,0:T(1,128)}', space=vmem, size = 0x12000, scoped, tag = 'internal scratch']
  #allocation2 [shape = 'f32[8,1]{1,0:T(8,128)}', space=vmem, size = 0x1000, scoped, tag = 'scratch operand']
  #allocation3 [shape = 'f32[8,1]{1,0:T(8,128)}', space=vmem, size = 0x1000, scoped, tag = 'scratch operand']
  %s0 = inlined_call_operand.vmem [shape: f32[16,32], index: 0, kind: input, shape index: {}]
  %s1 = inlined_call_operand.vmem [shape: f32[16,1], index: 1, kind: input, shape index: {}]
  %s2 = inlined_call_operand.vmem [shape: f32[256,32], index: 2, kind: input, shape index: {}]
  %s3 = inlined_call_operand.vmem [shape: f32[1,256], index: 3, kind: input, shape index: {}]
  %s4 = inlined_call_operand.vmem [shape: f32[16,1], index: 4, kind: output, shape index: {}]
  %s5 = sld [smem:[#allocation0]]
  $region57: #{tpu_custom_call.1} parent=0
    _
  %s7 = ssub.s32 1, %s5
  %s8 = scalar_select 0, %s7, %s5
  loop: start=0, step=1, limit=4
  $region2: #{tpu_custom_call.1} parent=0 // loop_pre_header
    _
  $region3: #{tpu_custom_call.1} parent=0 // loop_header
    %s10 = sphi 0, %s14
    %p11 = scmp.ge.s32.totalorder %s10, 4
    %s17 = sphi 0, %s29
    %s18 = sphi 0, %s25
    %s19 = sphi 0, %s17
    %s20 = sphi 0, %s18
    %s21 = sphi 0, %s19
    %s22 = sphi 0, %s20
    %s32 = sphi 0, %s34
    %s35 = sphi 0, %s32
    %s36 = sphi 0, %s35
    %s52 = sphi 0, %s36
    %s58 = sphi 0, %s60
    %s61 = sphi 0, %s58
    %s62 = sphi 0, %s61
    %s78 = sphi 0, %s62
    %s84 = sphi 0, %s86
    %s87 = sphi 0, %s84
    %s88 = sphi 0, %s87
    %s104 = sphi 0, %s88
    %s110 = sphi 0, %s112
    %s113 = sphi 0, %s110
    %s114 = sphi 0, %s113
    %s130 = sphi 0, %s114
    %s136 = sphi 0, %s138
    %s139 = sphi 0, %s136
    %s140 = sphi 0, %s139
    %s156 = sphi 0, %s140
  $region4: #{tpu_custom_call.1} parent=0 // loop_header_branch
    %13 = sbr.rel (%p11) target = $region8
  $region5: #{tpu_custom_call.1} parent=0 // loop_body
    %s15 = ssub.s32 %s10, 1
    %s16 = ssub.s32 %s10, 2
    %s23 = sadd.s32 1, %s18
    %p24 = scmp.ge.s32.totalorder %s23, 1
    %s25 = scalar_select %p24, 0, %s23
    %s26 = sadd.s32 1, %s17
    %s27 = scalar_select %p24, %s26, %s17
    %p28 = scmp.ge.s32.totalorder %s27, 2
    %s29 = scalar_select %p28, 0, %s27
    %s30 = ssub.s32 %s17, %s29
    %p31 = scmp.eq.s32.totalorder %s30, 0
    %s33 = sadd.s32 %s32, 1
    %s34 = scalar_select %p31, %s32, %s33
    %p37 = pneg %p31
    %p38 = scmp.eq.s32.totalorder %s10, 1
    %p39 = por %p37, %p38
    %p40 = scmp.ne.s32.totalorder %s32, %s35
    %p41 = scmp.eq.s32.totalorder %s10, 0
    %p42 = por %p40, %p41
    %p43 = scmp.ne.s32.totalorder %s32, %s35
    %p44 = scmp.eq.s32.totalorder %s15, 1
    %p45 = por %p43, %p44
    %p46 = scmp.ne.s32.totalorder %s35, %s36
    %p47 = scmp.eq.s32.totalorder %s15, 0
    %p48 = por %p46, %p47
    %p49 = scmp.ne.s32.totalorder %s35, %s36
    %p50 = scmp.eq.s32.totalorder %s16, 1
    %p51 = por %p49, %p50
    %p53 = scmp.ne.s32.totalorder %s36, %s52
    %p54 = scmp.eq.s32.totalorder %s16, 0
    %p55 = por %p53, %p54
    %s56 = ssub.s32 %s17, %s29
    %p57 = scmp.eq.s32.totalorder %s56, 0
    %s59 = sadd.s32 %s58, 1
    %s60 = scalar_select %p57, %s58, %s59
    %p63 = pneg %p57
    %p64 = scmp.eq.s32.totalorder %s10, 1
    %p65 = por %p63, %p64
    %p66 = scmp.ne.s32.totalorder %s58, %s61
    %p67 = scmp.eq.s32.totalorder %s10, 0
    %p68 = por %p66, %p67
    %p69 = scmp.ne.s32.totalorder %s58, %s61
    %p70 = scmp.eq.s32.totalorder %s15, 1
    %p71 = por %p69, %p70
    %p72 = scmp.ne.s32.totalorder %s61, %s62
    %p73 = scmp.eq.s32.totalorder %s15, 0
    %p74 = por %p72, %p73
    %p75 = scmp.ne.s32.totalorder %s61, %s62
    %p76 = scmp.eq.s32.totalorder %s16, 1
    %p77 = por %p75, %p76
    %p79 = scmp.ne.s32.totalorder %s62, %s78
    %p80 = scmp.eq.s32.totalorder %s16, 0
    %p81 = por %p79, %p80
    %s82 = ssub.s32 %s18, %s25
    %p83 = scmp.eq.s32.totalorder %s82, 0
    %s85 = sadd.s32 %s84, 1
    %s86 = scalar_select %p83, %s84, %s85
    %p89 = pneg %p83
    %p90 = scmp.eq.s32.totalorder %s10, 1
    %p91 = por %p89, %p90
    %p92 = scmp.ne.s32.totalorder %s84, %s87
    %p93 = scmp.eq.s32.totalorder %s10, 0
    %p94 = por %p92, %p93
    %p95 = scmp.ne.s32.totalorder %s84, %s87
    %p96 = scmp.eq.s32.totalorder %s15, 1
    %p97 = por %p95, %p96
    %p98 = scmp.ne.s32.totalorder %s87, %s88
    %p99 = scmp.eq.s32.totalorder %s15, 0
    %p100 = por %p98, %p99
    %p101 = scmp.ne.s32.totalorder %s87, %s88
    %p102 = scmp.eq.s32.totalorder %s16, 1
    %p103 = por %p101, %p102
    %p105 = scmp.ne.s32.totalorder %s88, %s104
    %p106 = scmp.eq.s32.totalorder %s16, 0
    %p107 = por %p105, %p106
    %s108 = ssub.s32 %s18, %s25
    %p109 = scmp.eq.s32.totalorder %s108, 0
    %s111 = sadd.s32 %s110, 1
    %s112 = scalar_select %p109, %s110, %s111
    %p115 = pneg %p109
    %p116 = scmp.eq.s32.totalorder %s10, 1
    %p117 = por %p115, %p116
    %p118 = scmp.ne.s32.totalorder %s110, %s113
    %p119 = scmp.eq.s32.totalorder %s10, 0
    %p120 = por %p118, %p119
    %p121 = scmp.ne.s32.totalorder %s110, %s113
    %p122 = scmp.eq.s32.totalorder %s15, 1
    %p123 = por %p121, %p122
    %p124 = scmp.ne.s32.totalorder %s113, %s114
    %p125 = scmp.eq.s32.totalorder %s15, 0
    %p126 = por %p124, %p125
    %p127 = scmp.ne.s32.totalorder %s113, %s114
    %p128 = scmp.eq.s32.totalorder %s16, 1
    %p129 = por %p127, %p128
    %p131 = scmp.ne.s32.totalorder %s114, %s130
    %p132 = scmp.eq.s32.totalorder %s16, 0
    %p133 = por %p131, %p132
    %s134 = ssub.s32 %s17, %s29
    %p135 = scmp.eq.s32.totalorder %s134, 0
    %s137 = sadd.s32 %s136, 1
    %s138 = scalar_select %p135, %s136, %s137
    %p141 = pneg %p135
    %p142 = scmp.eq.s32.totalorder %s10, 1
    %p143 = por %p141, %p142
    %p144 = scmp.ne.s32.totalorder %s136, %s139
    %p145 = scmp.eq.s32.totalorder %s10, 0
    %p146 = por %p144, %p145
    %p147 = scmp.ne.s32.totalorder %s136, %s139
    %p148 = scmp.eq.s32.totalorder %s15, 1
    %p149 = por %p147, %p148
    %p150 = scmp.ne.s32.totalorder %s139, %s140
    %p151 = scmp.eq.s32.totalorder %s15, 0
    %p152 = por %p150, %p151
    %p153 = scmp.ne.s32.totalorder %s139, %s140
    %p154 = scmp.eq.s32.totalorder %s16, 1
    %p155 = por %p153, %p154
    %p157 = scmp.ne.s32.totalorder %s140, %s156
    %p158 = scmp.eq.s32.totalorder %s16, 0
    %p159 = por %p157, %p158
    %p160 = scmp.le.s32.totalorder 1, %s10
    %p161 = scmp.lt.s32.totalorder %s10, 3
    %p162 = pnand %p160, %p161
    %p163 = pneg %p162
    // Predicated region
    $region9: #{tpu_custom_call.1} parent=5 // pred_check
      _
    $region10: #{tpu_custom_call.1} parent=5 // pred_check_branch
      %165 = sbr.rel (%p162) target = $region12
    $region11: #{tpu_custom_call.1} parent=5 // pred_region
      %s166 = ssub.s32 %s10, 1
      // Predicated region
      $region13: #{tpu_custom_call.1} parent=11 // pred_check
        %p167 = pneg %p100
      $region14: #{tpu_custom_call.1} parent=11 // pred_check_branch
        %169 = sbr.rel (%p167) target = $region16
      $region15: #{tpu_custom_call.1} parent=11 // pred_region
        %s170 = smul.u32 32, %s20
        %p171 = scmp.lt.s32.totalorder %s170, 31
        %s172 = scalar_select %p171, %s170, 31
        %s173 = smul.addr %s172, 8
        %s174 = scalar_lea.vmem %s2, %s173
        %s175 = smul.u32 32, %s20
      $region16: #{tpu_custom_call.1} parent=11 // pred_fallthru
        _
      // Predicated region
      $region17: #{tpu_custom_call.1} parent=11 // pred_check
        %p176 = pneg %p126
      $region18: #{tpu_custom_call.1} parent=11 // pred_check_branch
        %178 = sbr.rel (%p176) target = $region20
      $region19: #{tpu_custom_call.1} parent=11 // pred_region
        %s179 = smul.u32 2, %s20
        %p180 = scmp.lt.s32.totalorder %s179, 1
        %s181 = scalar_select %p180, %s179, 1
        %s182 = scalar_lea.vmem %s3, %s181
        %s183 = smul.u32 2, %s20
      $region20: #{tpu_custom_call.1} parent=11 // pred_fallthru
        _
    $region12: #{tpu_custom_call.1} parent=5 // pred_fallthru
      _
    %p184 = scmp.lt.s32.totalorder %s10, 2
    // Predicated region
    $region21: #{tpu_custom_call.1} parent=5 // pred_check
      %p185 = pneg %p184
    $region22: #{tpu_custom_call.1} parent=5 // pred_check_branch
      %187 = sbr.rel (%p185) target = $region24
    $region23: #{tpu_custom_call.1} parent=5 // pred_region
      // Predicated region
      $region25: #{tpu_custom_call.1} parent=23 // pred_check
        %p188 = pneg %p42
      $region26: #{tpu_custom_call.1} parent=23 // pred_check_branch
        %190 = sbr.rel (%p188) target = $region28
      $region27: #{tpu_custom_call.1} parent=23 // pred_region
        %p191 = scmp.lt.s32.totalorder %s17, 1
        %s192 = scalar_select %p191, %s17, 1
        %s193 = smul.addr %s192, 8
        %s194 = scalar_lea.vmem %s0, %s193
      $region28: #{tpu_custom_call.1} parent=23 // pred_fallthru
        _
      // Predicated region
      $region29: #{tpu_custom_call.1} parent=23 // pred_check
        %p195 = pneg %p68
      $region30: #{tpu_custom_call.1} parent=23 // pred_check_branch
        %197 = sbr.rel (%p195) target = $region32
      $region31: #{tpu_custom_call.1} parent=23 // pred_region
        %p198 = scmp.lt.s32.totalorder %s17, 1
        %s199 = scalar_select %p198, %s17, 1
        %s200 = smul.addr %s199, 8
        %s201 = scalar_lea.vmem %s1, %s200
      $region32: #{tpu_custom_call.1} parent=23 // pred_fallthru
        _
    $region24: #{tpu_custom_call.1} parent=5 // pred_fallthru
      _
    %p202 = scmp.le.s32.totalorder 1, %s10
    %p203 = scmp.lt.s32.totalorder %s10, 3
    %p204 = pnand %p202, %p203
    %p205 = pneg %p204
    // Predicated region
    $region33: #{tpu_custom_call.1} parent=5 // pred_check
      _
    $region34: #{tpu_custom_call.1} parent=5 // pred_check_branch
      %207 = sbr.rel (%p204) target = $region36
    $region35: #{tpu_custom_call.1} parent=5 // pred_region
      %s208 = ssub.s32 %s10, 1
      %p209 = scmp.lt.s32.totalorder %s19, 1
      %s210 = scalar_select %p209, %s19, 1
      %s211 = smul.addr %s210, 8
      %s212 = scalar_lea.vmem %s0, %s211
      %p213 = pneg %p48
      %p214 = pneg %p45
      %p215 = scmp.lt.s32.totalorder %s19, 1
      %s216 = scalar_select %p215, %s19, 1
      %s217 = smul.addr %s216, 8
      %s218 = scalar_lea.vmem %s1, %s217
      %p219 = pneg %p74
      %p220 = pneg %p71
      %s221 = smul.u32 32, %s20
      %p222 = scmp.lt.s32.totalorder %s221, 31
      %s223 = scalar_select %p222, %s221, 31
      %s224 = smul.addr %s223, 8
      %s225 = scalar_lea.vmem %s2, %s224
      %p226 = pneg %p100
      %p227 = pneg %p97
      %s228 = smul.u32 2, %s20
      %p229 = scmp.lt.s32.totalorder %s228, 1
      %s230 = scalar_select %p229, %s228, 1
      %s231 = scalar_lea.vmem %s3, %s230
      %p232 = pneg %p126
      %p233 = pneg %p123
      %p234 = pneg %p152
      %p235 = pneg %p149
      %p236 = scmp.lt.s32.totalorder %s19, 1
      %s237 = scalar_select %p236, %s19, 1
      %s238 = smul.addr %s237, 8
      %s239 = scalar_lea.vmem %s4, %s238
      %p240 = scmp.lt.s32.totalorder %s19, 1
      %s241 = scalar_select %p240, %s19, 1
      %s242 = smul.addr %s241, 8
      %s243 = scalar_lea.vmem %s0, %s242
      %p244 = scmp.lt.s32.totalorder %s19, 1
      %s245 = scalar_select %p244, %s19, 1
      %s246 = smul.addr %s245, 8
      %s247 = scalar_lea.vmem %s1, %s246
      %s248 = smul.u32 32, %s20
      %p249 = scmp.lt.s32.totalorder %s248, 31
      %s250 = scalar_select %p249, %s248, 31
      %s251 = smul.addr %s250, 8
      %s252 = scalar_lea.vmem %s2, %s251
      %s253 = smul.u32 32, %s20
      %s254 = smul.u32 2, %s20
      %p255 = scmp.lt.s32.totalorder %s254, 1
      %s256 = scalar_select %p255, %s254, 1
      %s257 = scalar_lea.vmem %s3, %s256
      %s258 = smul.u32 2, %s20
      %p259 = scmp.lt.s32.totalorder %s19, 1
      %s260 = scalar_select %p259, %s19, 1
      %s261 = smul.addr %s260, 8
      %s262 = scalar_lea.vmem %s4, %s261
      %p263 = scmp.eq.s32.totalorder %s20, 0
      // Predicated region
      $region37: #{tpu_custom_call.1} parent=35 // pred_check
        %p264 = pneg %p263
      $region38: #{tpu_custom_call.1} parent=35 // pred_check_branch
        %266 = sbr.rel (%p264) target = $region40
      $region39: #{tpu_custom_call.1} parent=35 // pred_region
        %vm267 = vcmask 7168
        %268 = vst.msk [vmem:[#allocation2] sm:$0xff] %vm267, -1e+30
        %269 = vst.msk [vmem:[#allocation3] sm:$0xff] %vm267, 0.0
      $region40: #{tpu_custom_call.1} parent=35 // pred_fallthru
        _
      %v270 = vld [vmem:[%s243] sm:$0xff]
      %v271 = vld [vmem:[%s252] sm:$0xff]
      %v272 = vld [vmem:[%s252 + $0x8] sm:$0xff]
      %v273 = vld [vmem:[%s252 + $0x10] sm:$0xff]
      %v274 = vld [vmem:[%s252 + $0x18] sm:$0xff]
      %v275 = vld [vmem:[%s252 + $0x20] sm:$0xff]
      %v276 = vld [vmem:[%s252 + $0x28] sm:$0xff]
      %v277 = vld [vmem:[%s252 + $0x30] sm:$0xff]
      %v278 = vld [vmem:[%s252 + $0x38] sm:$0xff]
      %v279 = vld [vmem:[%s252 + $0x40] sm:$0xff]
      %v280 = vld [vmem:[%s252 + $0x48] sm:$0xff]
      %v281 = vld [vmem:[%s252 + $0x50] sm:$0xff]
      %v282 = vld [vmem:[%s252 + $0x58] sm:$0xff]
      %v283 = vld [vmem:[%s252 + $0x60] sm:$0xff]
      %v284 = vld [vmem:[%s252 + $0x68] sm:$0xff]
      %v285 = vld [vmem:[%s252 + $0x70] sm:$0xff]
      %v286 = vld [vmem:[%s252 + $0x78] sm:$0xff]
      %v287 = vld [vmem:[%s252 + $0x80] sm:$0xff]
      %v288 = vld [vmem:[%s252 + $0x88] sm:$0xff]
      %v289 = vld [vmem:[%s252 + $0x90] sm:$0xff]
      %v290 = vld [vmem:[%s252 + $0x98] sm:$0xff]
      %v291 = vld [vmem:[%s252 + $0xa0] sm:$0xff]
      %v292 = vld [vmem:[%s252 + $0xa8] sm:$0xff]
      %v293 = vld [vmem:[%s252 + $0xb0] sm:$0xff]
      %v294 = vld [vmem:[%s252 + $0xb8] sm:$0xff]
      %v295 = vld [vmem:[%s252 + $0xc0] sm:$0xff]
      %v296 = vld [vmem:[%s252 + $0xc8] sm:$0xff]
      %v297 = vld [vmem:[%s252 + $0xd0] sm:$0xff]
      %v298 = vld [vmem:[%s252 + $0xd8] sm:$0xff]
      %v299 = vld [vmem:[%s252 + $0xe0] sm:$0xff]
      %v300 = vld [vmem:[%s252 + $0xe8] sm:$0xff]
      %v301 = vld [vmem:[%s252 + $0xf0] sm:$0xff]
      %v302 = vld [vmem:[%s252 + $0xf8] sm:$0xff]
      %v303 = vld [vmem:[%s257] sm:$0x3]
      %v305 = vlaneseq
      %v306 = vshrl.u32 %v305, 7
      %v307 = vsub.s32 0, %v306
      %v308 = vrot.slane %v303, %v307
      %v309 = vlaneseq
      %v310 = vshrl.u32 %v309, 7
      %v311 = vsub.s32 1, %v310
      %v312 = vrot.slane %v303, %v311
      %vm315 = vcmask 261120
      %v317 = vsel %vm315, %v270, 0
      %v320 = vsel %vm315, %v271, 0
      %v323 = vsel %vm315, %v272, 0
      %v326 = vsel %vm315, %v273, 0
      %v329 = vsel %vm315, %v274, 0
      %v332 = vsel %vm315, %v275, 0
      %v335 = vsel %vm315, %v276, 0
      %v338 = vsel %vm315, %v277, 0
      %v341 = vsel %vm315, %v278, 0
      %v344 = vsel %vm315, %v279, 0
      %v347 = vsel %vm315, %v280, 0
      %v350 = vsel %vm315, %v281, 0
      %v353 = vsel %vm315, %v282, 0
      %v356 = vsel %vm315, %v283, 0
      %v359 = vsel %vm315, %v284, 0
      %v362 = vsel %vm315, %v285, 0
      %v365 = vsel %vm315, %v286, 0
      %v368 = vsel %vm315, %v287, 0
      %v371 = vsel %vm315, %v288, 0
      %v374 = vsel %vm315, %v289, 0
      %v377 = vsel %vm315, %v290, 0
      %v380 = vsel %vm315, %v291, 0
      %v383 = vsel %vm315, %v292, 0
      %v386 = vsel %vm315, %v293, 0
      %v389 = vsel %vm315, %v294, 0
      %v392 = vsel %vm315, %v295, 0
      %v395 = vsel %vm315, %v296, 0
      %v398 = vsel %vm315, %v297, 0
      %v401 = vsel %vm315, %v298, 0
      %v404 = vsel %vm315, %v299, 0
      %v407 = vsel %vm315, %v300, 0
      %v410 = vsel %vm315, %v301, 0
      %v413 = vsel %vm315, %v302, 0
      %415 = vmatprep.subr.mxu0 0.0
      %416 = vmatpush1.xpose.msra.mxu0 %v320
      %417 = vmatprep.subr.mxu0 0.0
      %418 = vmatpush1.xpose.msra.mxu0 %v323
      %419 = vmatprep.subr.mxu0 0.0
      %420 = vmatpush1.xpose.msra.mxu0 %v326
      %421 = vmatprep.subr.mxu0 0.0
      %422 = vmatpush1.xpose.msra.mxu0 %v329
      %423 = vmatprep.subr.mxu0 0.0
      %424 = vmatpush1.xpose.msra.mxu0 %v332
      %425 = vmatprep.subr.mxu0 0.0
      %426 = vmatpush1.xpose.msra.mxu0 %v335
      %427 = vmatprep.subr.mxu0 0.0
      %428 = vmatpush1.xpose.msra.mxu0 %v338
      %429 = vmatprep.subr.mxu0 0.0
      %430 = vmatpush1.xpose.msra.mxu0 %v341
      %431 = vmatprep.subr.mxu0 0.0
      %432 = vmatpush1.xpose.msra.mxu0 %v344
      %433 = vmatprep.subr.mxu0 0.0
      %434 = vmatpush1.xpose.msra.mxu0 %v347
      %435 = vmatprep.subr.mxu0 0.0
      %436 = vmatpush1.xpose.msra.mxu0 %v350
      %437 = vmatprep.subr.mxu0 0.0
      %438 = vmatpush1.xpose.msra.mxu0 %v353
      %439 = vmatprep.subr.mxu0 0.0
      %440 = vmatpush1.xpose.msra.mxu0 %v356
      %441 = vmatprep.subr.mxu0 0.0
      %442 = vmatpush1.xpose.msra.mxu0 %v359
      %443 = vmatprep.subr.mxu0 0.0
      %444 = vmatpush1.xpose.msra.mxu0 %v362
      %445 = vmatprep.subr.mxu0 0.0
      %446 = vmatpush1.xpose.msra.mxu0 %v365
      %447 = vmatprep.subr.mxu0 0.0
      %448 = vmatpush1.xpose.msra.mxu0 %v368
      %449 = vmatprep.subr.mxu0 0.0
      %450 = vmatpush1.xpose.msra.mxu0 %v371
      %451 = vmatprep.subr.mxu0 0.0
      %452 = vmatpush1.xpose.msra.mxu0 %v374
      %453 = vmatprep.subr.mxu0 0.0
      %454 = vmatpush1.xpose.msra.mxu0 %v377
      %455 = vmatprep.subr.mxu0 0.0
      %456 = vmatpush1.xpose.msra.mxu0 %v380
      %457 = vmatprep.subr.mxu0 0.0
      %458 = vmatpush1.xpose.msra.mxu0 %v383
      %459 = vmatprep.subr.mxu0 0.0
      %460 = vmatpush1.xpose.msra.mxu0 %v386
      %461 = vmatprep.subr.mxu0 0.0
      %462 = vmatpush1.xpose.msra.mxu0 %v389
      %463 = vmatprep.subr.mxu0 0.0
      %464 = vmatpush1.xpose.msra.mxu0 %v392
      %465 = vmatprep.subr.mxu0 0.0
      %466 = vmatpush1.xpose.msra.mxu0 %v395
      %467 = vmatprep.subr.mxu0 0.0
      %468 = vmatpush1.xpose.msra.mxu0 %v398
      %469 = vmatprep.subr.mxu0 0.0
      %470 = vmatpush1.xpose.msra.mxu0 %v401
      %471 = vmatprep.subr.mxu0 0.0
      %472 = vmatpush1.xpose.msra.mxu0 %v404
      %473 = vmatprep.subr.mxu0 0.0
      %474 = vmatpush1.xpose.msra.mxu0 %v407
      %475 = vmatprep.subr.mxu0 0.0
      %476 = vmatpush1.xpose.msra.mxu0 %v410
      %477 = vmatprep.subr.mxu0 0.0
      %478 = vmatpush1.xpose.msra.mxu0 %v413
      %479 = vmatprep.mubr.f32.mxu0 0.0
      %480 = vmatmul.mubr.f32.gmra.mrb[0].mxu0 %v317
      %v481 = vpop.f32.mrb[0].mxu0
      %v482 = vadd.f32 %v308, %v481
      %v483 = vpop.f32.mrb[0].mxu0
      %v484 = vadd.f32 %v312, %v483
      %485 = vdwg.mxu0
      %v486 = vld [vmem:[#allocation2] sm:$0xff]
      %v487 = vmax.f32 %v482, %v484
      %488 = vmax.xlane.f32.xlu0 %v487
      %v489 = vpop.xlane.xlu0 %488
      %v490 = vmax.f32 %v486, %v489
      %v491 = vsub.f32 %v486, %v490
      %v492 = vmul.f32 %v491, 1.442695
      %v493 = vpow.pop %v492
      %495 = vset.pattern.permute.xlu0 0
      %496 = vperm.xlu0 %495, %v490
      %v497 = vpop.permute.xlu0 %496
      %v499 = vsub.f32 %v482, %v497
      %v500 = vsub.f32 %v484, %v497
      %v501 = vmul.f32 %v499, 1.442695
      %v502 = vpow.pop %v501
      %v503 = vmul.f32 %v500, 1.442695
      %v504 = vpow.pop %v503
      %v505 = vadd.f32 %v502, %v504
      %506 = vadd.xlane.f32.xlu0 %v505
      %v507 = vpop.xlane.xlu0 %506
      %v508 = vld [vmem:[#allocation3] sm:$0xff]
      %v509 = vmul.f32 %v493, %v508
      %v510 = vadd.f32 %v509, %v507
      %vm511 = vcmask 7168
      %512 = vst.msk [vmem:[#allocation3] sm:$0xff] %vm511, %v510
      %513 = vst.msk [vmem:[#allocation2] sm:$0xff] %vm511, %v490
      // Predicated region
      $region41: #{tpu_custom_call.1} parent=35 // pred_check
        %p514 = pneg %p263
      $region42: #{tpu_custom_call.1} parent=35 // pred_check_branch
        %516 = sbr.rel (%p514) target = $region44
      $region43: #{tpu_custom_call.1} parent=35 // pred_region
        %v517 = vld [vmem:[%s247] sm:$0xff]
        %v518 = vld [vmem:[#allocation2] sm:$0xff]
        %v519 = vadd.f32 %v517, %v518
        %v520 = vld [vmem:[#allocation3] sm:$0xff]
        %v521 = vlog2.pop %v520
        %v522 = vmul.f32 %v521, 0.6931472
        %v523 = vadd.f32 %v519, %v522
        %524 = vst.msk [vmem:[%s262] sm:$0xff] %vm511, %v523
      $region44: #{tpu_custom_call.1} parent=35 // pred_fallthru
        _
      %p525 = scmp.lt.s32.totalorder %s19, 1
      %s526 = scalar_select %p525, %s19, 1
      %s527 = smul.addr %s526, 8
      %s528 = scalar_lea.vmem %s4, %s527
      // Predicated region
      $region45: #{tpu_custom_call.1} parent=35 // pred_check
        %p529 = pneg %p149
      $region46: #{tpu_custom_call.1} parent=35 // pred_check_branch
        %531 = sbr.rel (%p529) target = $region48
      $region47: #{tpu_custom_call.1} parent=35 // pred_region
        _
      $region48: #{tpu_custom_call.1} parent=35 // pred_fallthru
        _
    $region36: #{tpu_custom_call.1} parent=5 // pred_fallthru
      _
    %p532 = scmp.le.s32.totalorder 2, %s10
    // Predicated region
    $region49: #{tpu_custom_call.1} parent=5 // pred_check
      %p533 = pneg %p532
    $region50: #{tpu_custom_call.1} parent=5 // pred_check_branch
      %535 = sbr.rel (%p533) target = $region52
    $region51: #{tpu_custom_call.1} parent=5 // pred_region
      %s536 = ssub.s32 %s10, 2
      // Predicated region
      $region53: #{tpu_custom_call.1} parent=51 // pred_check
        %p537 = pneg %p155
      $region54: #{tpu_custom_call.1} parent=51 // pred_check_branch
        %539 = sbr.rel (%p537) target = $region56
      $region55: #{tpu_custom_call.1} parent=51 // pred_region
        %p540 = scmp.lt.s32.totalorder %s21, 1
        %s541 = scalar_select %p540, %s21, 1
        %s542 = smul.addr %s541, 8
        %s543 = scalar_lea.vmem %s4, %s542
      $region56: #{tpu_custom_call.1} parent=51 // pred_fallthru
        _
    $region52: #{tpu_custom_call.1} parent=5 // pred_fallthru
      _
  $region6: #{tpu_custom_call.1} parent=0 // loop_footer
    %s14 = sadd.s32 1, %s10
  $region7: #{tpu_custom_call.1} parent=0 // loop_footer_branch
    %9 = sbr.rel target = $region3
  $region8: #{tpu_custom_call.1} parent=0 // loop_exit
    _

</llo_original>
